<compile_context>
chip_gen: v7x
topology: tpu7x:2x2x1
jax: 0.10.0
libtpu: 0.0.40
codegen_flags: <defaults>
</compile_context>

<pallas_src>
import functools

import jax
import jax.numpy as jnp
from jax.experimental import pallas as pl
from jax.experimental.pallas import tpu as pltpu


def _bottleneck_kernel(x_ref, w1_ref, w2_ref, b1_ref, b2_ref, o_ref, *,
                       TH, H, W, c_in, c_hid, c_out, use_add):
    # x_ref : (1, H+2, W*Cin)   row-padded image (one batch element, resident
    #                            across the row-tile axis)
    # w1_ref: (W*Cin, W*Chid)   block-diagonal 1x1-conv weight, BN-scale folded, bf16
    # w2_ref: (3, W*Chid, W*Cout) banded 3x3-conv weights (one per kh), BN-scale
    #                            folded, bf16
    # b*    : (1, W*Chid) / (1, W*Cout) folded BN shifts, lane-dense fp32
    # o_ref : (1, TH, W*Cout)
    t = pl.program_id(1)
    r0 = t * TH                               # start row in the row-padded input
    if TH % 8 == 0:
        r0 = pl.multiple_of(r0, 8)

    # TH output rows need TH+2 input rows (halo of 1 for the 3x3 conv).
    x_halo = x_ref[0, pl.ds(r0, TH + 2), :]                   # (TH+2, W*Cin) f32

    # ---- conv1 (1x1) as a single block-diagonal MXU matmul + BN + SiLU ------
    y1 = jnp.dot(x_halo.astype(jnp.bfloat16), w1_ref[...],
                 preferred_element_type=jnp.float32)          # (TH+2, W*Chid)
    y1 = y1 + b1_ref[...]
    y1 = y1 * jax.nn.sigmoid(y1)

    # Rows that correspond to conv2's zero padding (top/bottom of the image)
    # must contribute zero to conv2 (silu(bn(0)) != 0).  In padded coords rows
    # 1..H are real rows.
    row = r0 + jax.lax.broadcasted_iota(jnp.int32, (TH + 2, 1), 0)
    y1 = jnp.where((row >= 1) & (row <= H), y1, 0.0).astype(jnp.bfloat16)

    # ---- conv2 (3x3) as 3 banded matmuls over row-shifted y1 ----------------
    acc = jnp.zeros((TH, W * c_out), jnp.float32)
    for kh in range(3):                       # static unroll; sublane shifts only
        acc += jnp.dot(jax.lax.slice(y1, (kh, 0), (kh + TH, W * c_hid)),
                       w2_ref[kh], preferred_element_type=jnp.float32)

    y2 = acc + b2_ref[...]
    y2 = y2 * jax.nn.sigmoid(y2)

    # ---- optional residual (fp32, reuses the already-loaded halo) -----------
    if use_add:
        y2 = y2 + jax.lax.slice(x_halo, (1, 0), (1 + TH, W * c_in))

    o_ref[...] = y2.reshape(1, TH, W * c_out).astype(o_ref.dtype)


def _fold_bn(gamma, beta, mean, var, eps, W):
    """Fold BN into per-channel scale and lane-dense (1, W*C) shift."""
    scale = (gamma / jnp.sqrt(var + eps)).astype(jnp.float32)       # (C,)
    shift = (beta - mean * scale).astype(jnp.float32)               # (C,)
    C = scale.shape[0]
    return scale, jnp.tile(shift, W).reshape(1, W * C)


def _block_diag_1x1(w1_io, W):
    """(Cin, Chid) -> (W*Cin, W*Chid) block-diagonal matrix (per-pixel 1x1 conv)."""
    return jnp.einsum("wv,io->wivo", jnp.eye(W, dtype=w1_io.dtype),
                      w1_io).reshape(W * w1_io.shape[0], W * w1_io.shape[1])


def _banded_3x3(w2_hwio, W):
    """(3,3,Chid,Cout) -> (3, W*Chid, W*Cout) banded matrices.

    B[kh][(w+kw-1)*Chid + ch, w*Cout + co] = W2[kh, kw, ch, co]; out-of-range
    w+kw-1 entries are absent, which implements the conv's w-side zero padding
    inside the weight matrix.
    """
    KH, KW, ci, co = w2_hwio.shape
    bands = []
    for kh in range(KH):
        b = jnp.zeros((W * ci, W * co), dtype=w2_hwio.dtype)
        for kw in range(KW):
            shift = jnp.eye(W, k=-(kw - 1), dtype=w2_hwio.dtype)
            b = b + jnp.einsum("wv,io->wivo", shift,
                               w2_hwio[kh, kw]).reshape(W * ci, W * co)
        bands.append(b)
    return jnp.stack(bands)


def bottleneck(x_nchw, w1_io, w2_hwio, bn1, bn2, *, shortcut=True,
               eps=1e-5, row_tile=8):
    """Bottleneck forward: y = BaseConv3x3(BaseConv1x1(x)); y += x if shortcut."""
    N, Cin, H, W = x_nchw.shape
    wci, Chid = w1_io.shape
    KH, KW, wch, Cout = w2_hwio.shape
    assert wci == Cin and wch == Chid and KH == 3 and KW == 3
    use_add = bool(shortcut) and (Cin == Cout)

    # Only wrapper-side relayout: NCHW -> (N, H, W*C) (channels-last, lane-dense)
    # plus one zero row of halo top/bottom for the 3x3 conv's h-padding.
    x = jnp.transpose(x_nchw, (0, 2, 3, 1)).reshape(N, H, W * Cin)
    x = jnp.pad(x, ((0, 0), (1, 1), (0, 0)))

    TH = row_tile if (H % row_tile == 0 and row_tile % 8 == 0) else H
    T = H // TH

    # Fold BN (inference) into the weights + lane-dense shifts.
    s1, b1 = _fold_bn(*bn1, eps, W)                                  # (Chid,), (1, W*Chid)
    s2, b2 = _fold_bn(*bn2, eps, W)                                  # (Cout,), (1, W*Cout)

    # Lane-dense matmul operands (bf16 for the MXU), BN scale folded in fp32.
    w1_block = (_block_diag_1x1(w1_io.astype(jnp.float32), W)
                * jnp.tile(s1, W)[None, :]).astype(jnp.bfloat16)     # (W*Cin, W*Chid)
    w2_bands = (_banded_3x3(w2_hwio.astype(jnp.float32), W)
                * jnp.tile(s2, W)[None, None, :]).astype(jnp.bfloat16)  # (3, W*Chid, W*Cout)

    kernel = functools.partial(
        _bottleneck_kernel, TH=TH, H=H, W=W,
        c_in=Cin, c_hid=Chid, c_out=Cout, use_add=use_add)

    out = pl.pallas_call(
        kernel,
        out_shape=jax.ShapeDtypeStruct((N, H, W * Cout), x_nchw.dtype),
        grid_spec=pltpu.PrefetchScalarGridSpec(
            num_scalar_prefetch=0,
            grid=(N, T),
            in_specs=[
                # full (row-padded) image per batch element; stays resident
                # across the row-tile axis (block index does not change with t).
                pl.BlockSpec((1, H + 2, W * Cin), lambda n, t: (n, 0, 0)),
                pl.BlockSpec((W * Cin, W * Chid), lambda n, t: (0, 0)),
                pl.BlockSpec((3, W * Chid, W * Cout), lambda n, t: (0, 0, 0)),
                pl.BlockSpec((1, W * Chid), lambda n, t: (0, 0)),
                pl.BlockSpec((1, W * Cout), lambda n, t: (0, 0)),
            ],
            out_specs=pl.BlockSpec((1, TH, W * Cout), lambda n, t: (n, t, 0)),
        ),
        compiler_params=pltpu.CompilerParams(
            dimension_semantics=("parallel", "parallel"),
            vmem_limit_bytes=32 * 1024 * 1024),
    )(x, w1_block, w2_bands, b1, b2)

    # (N, H, W*Cout) -> NCHW (back to the module's API).
    return jnp.transpose(out.reshape(N, H, W, Cout), (0, 3, 1, 2))


def _reference(x_nchw, w1_io, w2_hwio, bn1, bn2, *, shortcut=True, eps=1e-5):
    def bn_silu(y, bn):
        g, b, m, v = bn
        s = g / jnp.sqrt(v + eps)
        y = y * s + (b - m * s)
        return y * jax.nn.sigmoid(y)

    x = jnp.transpose(x_nchw, (0, 2, 3, 1)).astype(jnp.float32)
    y = jnp.einsum("nhwi,io->nhwo", x, w1_io.astype(jnp.float32))    # 1x1 conv
    y = bn_silu(y, bn1)
    y = jax.lax.conv_general_dilated(
        y, w2_hwio.astype(jnp.float32), (1, 1), ((1, 1), (1, 1)),
        dimension_numbers=("NHWC", "HWIO", "NHWC"))
    y = bn_silu(y, bn2)
    y = jnp.transpose(y, (0, 3, 1, 2)).astype(x_nchw.dtype)
    if shortcut and x_nchw.shape[1] == y.shape[1]:
        y = y + x_nchw
    return y


if __name__ == "__main__":
    # Bottleneck(in=8, out=8, shortcut=True, expansion=0.5): hidden = 4.
    N, C, H, W = 2, 8, 16, 16
    Chid = int(C * 0.5)

    key = jax.random.PRNGKey(0)
    ks = jax.random.split(key, 11)

    x = jax.random.normal(ks[0], (N, C, H, W), dtype=jnp.float32)
    w1 = 0.1 * jax.random.normal(ks[1], (C, Chid), dtype=jnp.float32)        # 1x1 (Cin, Chid)
    w2 = 0.1 * jax.random.normal(ks[2], (3, 3, Chid, C), dtype=jnp.float32)  # HWIO

    bn1 = (1.0 + 0.1 * jax.random.normal(ks[3], (Chid,), jnp.float32),
           0.1 * jax.random.normal(ks[4], (Chid,), jnp.float32),
           0.1 * jax.random.normal(ks[5], (Chid,), jnp.float32),
           0.5 + jnp.abs(jax.random.normal(ks[6], (Chid,), jnp.float32)))
    bn2 = (1.0 + 0.1 * jax.random.normal(ks[7], (C,), jnp.float32),
           0.1 * jax.random.normal(ks[8], (C,), jnp.float32),
           0.1 * jax.random.normal(ks[9], (C,), jnp.float32),
           0.5 + jnp.abs(jax.random.normal(ks[10], (C,), jnp.float32)))

    out = bottleneck(x, w1, w2, bn1, bn2, shortcut=True)
    out = jax.block_until_ready(out)

    ref = _reference(x, w1, w2, bn1, bn2, shortcut=True)
    assert out.shape == (N, C, H, W)
    # bf16 matmul operands (fp32 accumulation) -> relaxed tolerance vs fp32 ref.
    assert jnp.allclose(out, ref, atol=2e-2, rtol=2e-2), "mismatch vs reference"

    print("KERNEL_OK")
</pallas_src>

<mosaic_0001>
module attributes {stable_mosaic.version = 11 : i64} {
  func.func @_bottleneck_kernel(%arg0: i32, %arg1: i32, %arg2: memref<1x18x128xf32, #tpu.memory_space<vmem>>, %arg3: memref<128x64xbf16, #tpu.memory_space<vmem>>, %arg4: memref<3x64x128xbf16, #tpu.memory_space<vmem>>, %arg5: memref<1x64xf32, #tpu.memory_space<vmem>>, %arg6: memref<1x128xf32, #tpu.memory_space<vmem>>, %arg7: memref<1x8x128xf32, #tpu.memory_space<vmem>>) attributes {dimension_semantics = [#tpu.dimension_semantics<parallel>, #tpu.dimension_semantics<parallel>], iteration_bounds = array<i64: 2, 2>, scalar_prefetch = 0 : i64, scratch_operands = 0 : i64, tpu.core_type = #tpu.core_type<tc>, window_params = [{transform_indices = @transform_0, window_bounds = array<i64: 1, 18, 128>}, {pipeline_mode = #tpu.pipeline_mode<synchronous>, transform_indices = @transform_1, window_bounds = array<i64: 128, 64>}, {pipeline_mode = #tpu.pipeline_mode<synchronous>, transform_indices = @transform_2, window_bounds = array<i64: 3, 64, 128>}, {pipeline_mode = #tpu.pipeline_mode<synchronous>, transform_indices = @transform_3, window_bounds = array<i64: 1, 64>}, {pipeline_mode = #tpu.pipeline_mode<synchronous>, transform_indices = @transform_4, window_bounds = array<i64: 1, 128>}, {transform_indices = @transform_5, window_bounds = array<i64: 1, 8, 128>}]} {
    %c8_i32 = arith.constant 8 : i32
    %0 = arith.muli %arg1, %c8_i32 : i32
    %1 = tpu.assume_multiple %0, 8 : i32
    %c0 = arith.constant 0 : index
    %2 = arith.index_cast %1 : i32 to index
    %c0_0 = arith.constant 0 : index
    %3 = vector.load %arg2[%c0, %2, %c0_0] : memref<1x18x128xf32, #tpu.memory_space<vmem>>, vector<1x10x128xf32>
    %4 = vector.shape_cast %3 : vector<1x10x128xf32> to vector<10x128xf32>
    %5 = arith.truncf %4 : vector<10x128xf32> to vector<10x128xbf16>
    %c0_1 = arith.constant 0 : index
    %c0_2 = arith.constant 0 : index
    %6 = vector.load %arg3[%c0_1, %c0_2] : memref<128x64xbf16, #tpu.memory_space<vmem>>, vector<128x64xbf16>
    %cst = arith.constant dense<0.000000e+00> : vector<10x64xf32>
    %7 = tpu.matmul %5, %6, %cst {dimension_numbers = #tpu.dot_dimension_numbers<[1], [0], [0], [1], [0, 0, 1, 1], [], []>} : vector<10x128xbf16>, vector<128x64xbf16>, vector<10x64xf32> -> vector<10x64xf32>
    %c0_3 = arith.constant 0 : index
    %c0_4 = arith.constant 0 : index
    %8 = vector.load %arg5[%c0_3, %c0_4] : memref<1x64xf32, #tpu.memory_space<vmem>>, vector<1x64xf32>
    %9 = vector.broadcast %8 : vector<1x64xf32> to vector<10x64xf32>
    %10 = arith.addf %7, %9 : vector<10x64xf32>
    %11 = arith.negf %10 : vector<10x64xf32>
    %12 = math.exp %11 : vector<10x64xf32>
    %cst_5 = arith.constant 1.000000e+00 : f32
    %13 = vector.broadcast %cst_5 : f32 to vector<10x64xf32>
    %14 = arith.addf %13, %12 : vector<10x64xf32>
    %15 = arith.divf %13, %14 : vector<10x64xf32>
    %16 = arith.mulf %10, %15 : vector<10x64xf32>
    %17 = tpu.iota {dimensions = array<i32: 0>} : vector<10x1xi32>
    %18 = vector.broadcast %1 : i32 to vector<10x1xi32>
    %19 = arith.addi %18, %17 : vector<10x1xi32>
    %c1_i32 = arith.constant 1 : i32
    %20 = vector.broadcast %c1_i32 : i32 to vector<10x1xi32>
    %21 = arith.cmpi sge, %19, %20 : vector<10x1xi32>
    %c16_i32 = arith.constant 16 : i32
    %22 = vector.broadcast %c16_i32 : i32 to vector<10x1xi32>
    %23 = arith.cmpi sle, %19, %22 : vector<10x1xi32>
    %24 = arith.andi %21, %23 : vector<10x1xi1>
    %cst_6 = arith.constant 0.000000e+00 : f32
    %25 = vector.shape_cast %24 : vector<10x1xi1> to vector<10x1xi1>
    %26 = vector.broadcast %25 : vector<10x1xi1> to vector<10x64xi1>
    %27 = vector.broadcast %cst_6 : f32 to vector<10x64xf32>
    %28 = arith.select %26, %16, %27 : vector<10x64xi1>, vector<10x64xf32>
    %29 = arith.truncf %28 : vector<10x64xf32> to vector<10x64xbf16>
    %cst_7 = arith.constant 0.000000e+00 : f32
    %30 = vector.broadcast %cst_7 : f32 to vector<8x128xf32>
    %31 = vector.extract_strided_slice %29 {offsets = [0, 0], sizes = [8, 64], strides = [1, 1]} : vector<10x64xbf16> to vector<8x64xbf16>
    %c0_8 = arith.constant 0 : index
    %c0_9 = arith.constant 0 : index
    %c0_10 = arith.constant 0 : index
    %32 = vector.load %arg4[%c0_8, %c0_9, %c0_10] : memref<3x64x128xbf16, #tpu.memory_space<vmem>>, vector<1x64x128xbf16>
    %33 = vector.shape_cast %32 : vector<1x64x128xbf16> to vector<64x128xbf16>
    %cst_11 = arith.constant dense<0.000000e+00> : vector<8x128xf32>
    %34 = tpu.matmul %31, %33, %cst_11 {dimension_numbers = #tpu.dot_dimension_numbers<[1], [0], [0], [1], [0, 0, 1, 1], [], []>} : vector<8x64xbf16>, vector<64x128xbf16>, vector<8x128xf32> -> vector<8x128xf32>
    %35 = arith.addf %30, %34 : vector<8x128xf32>
    %36 = vector.extract_strided_slice %29 {offsets = [1, 0], sizes = [8, 64], strides = [1, 1]} : vector<10x64xbf16> to vector<8x64xbf16>
    %c1 = arith.constant 1 : index
    %c0_12 = arith.constant 0 : index
    %c0_13 = arith.constant 0 : index
    %37 = vector.load %arg4[%c1, %c0_12, %c0_13] : memref<3x64x128xbf16, #tpu.memory_space<vmem>>, vector<1x64x128xbf16>
    %38 = vector.shape_cast %37 : vector<1x64x128xbf16> to vector<64x128xbf16>
    %cst_14 = arith.constant dense<0.000000e+00> : vector<8x128xf32>
    %39 = tpu.matmul %36, %38, %cst_14 {dimension_numbers = #tpu.dot_dimension_numbers<[1], [0], [0], [1], [0, 0, 1, 1], [], []>} : vector<8x64xbf16>, vector<64x128xbf16>, vector<8x128xf32> -> vector<8x128xf32>
    %40 = arith.addf %35, %39 : vector<8x128xf32>
    %41 = vector.extract_strided_slice %29 {offsets = [2, 0], sizes = [8, 64], strides = [1, 1]} : vector<10x64xbf16> to vector<8x64xbf16>
    %c2 = arith.constant 2 : index
    %c0_15 = arith.constant 0 : index
    %c0_16 = arith.constant 0 : index
    %42 = vector.load %arg4[%c2, %c0_15, %c0_16] : memref<3x64x128xbf16, #tpu.memory_space<vmem>>, vector<1x64x128xbf16>
    %43 = vector.shape_cast %42 : vector<1x64x128xbf16> to vector<64x128xbf16>
    %cst_17 = arith.constant dense<0.000000e+00> : vector<8x128xf32>
    %44 = tpu.matmul %41, %43, %cst_17 {dimension_numbers = #tpu.dot_dimension_numbers<[1], [0], [0], [1], [0, 0, 1, 1], [], []>} : vector<8x64xbf16>, vector<64x128xbf16>, vector<8x128xf32> -> vector<8x128xf32>
    %45 = arith.addf %40, %44 : vector<8x128xf32>
    %c0_18 = arith.constant 0 : index
    %c0_19 = arith.constant 0 : index
    %46 = vector.load %arg6[%c0_18, %c0_19] : memref<1x128xf32, #tpu.memory_space<vmem>>, vector<1x128xf32>
    %47 = vector.broadcast %46 : vector<1x128xf32> to vector<8x128xf32>
    %48 = arith.addf %45, %47 : vector<8x128xf32>
    %49 = arith.negf %48 : vector<8x128xf32>
    %50 = math.exp %49 : vector<8x128xf32>
    %cst_20 = arith.constant 1.000000e+00 : f32
    %51 = vector.broadcast %cst_20 : f32 to vector<8x128xf32>
    %52 = arith.addf %51, %50 : vector<8x128xf32>
    %53 = arith.divf %51, %52 : vector<8x128xf32>
    %54 = arith.mulf %48, %53 : vector<8x128xf32>
    %55 = vector.extract_strided_slice %4 {offsets = [1, 0], sizes = [8, 128], strides = [1, 1]} : vector<10x128xf32> to vector<8x128xf32>
    %56 = arith.addf %54, %55 : vector<8x128xf32>
    %57 = vector.shape_cast %56 : vector<8x128xf32> to vector<1x8x128xf32>
    %c0_21 = arith.constant 0 : index
    %c0_22 = arith.constant 0 : index
    %c0_23 = arith.constant 0 : index
    %58 = vector.load %arg7[%c0_21, %c0_22, %c0_23] : memref<1x8x128xf32, #tpu.memory_space<vmem>>, vector<1x8x128xf32>
    tpu.vector_store %arg7[%c0_21, %c0_22, %c0_23], %57 {strides = array<i32>} : memref<1x8x128xf32, #tpu.memory_space<vmem>>, vector<1x8x128xf32>,
    return
  }
  func.func @transform_0(%arg0: i32, %arg1: i32) -> (i32, i32, i32) {
    %c0_i32 = arith.constant 0 : i32
    %c0_i32_0 = arith.constant 0 : i32
    %c0_i32_1 = arith.constant 0 : i32
    return %arg0, %c0_i32, %c0_i32_0 : i32, i32, i32
  }
  func.func @transform_1(%arg0: i32, %arg1: i32) -> (i32, i32) {
    %c0_i32 = arith.constant 0 : i32
    %c0_i32_0 = arith.constant 0 : i32
    %c0_i32_1 = arith.constant 0 : i32
    return %c0_i32, %c0_i32_0 : i32, i32
  }
  func.func @transform_2(%arg0: i32, %arg1: i32) -> (i32, i32, i32) {
    %c0_i32 = arith.constant 0 : i32
    %c0_i32_0 = arith.constant 0 : i32
    %c0_i32_1 = arith.constant 0 : i32
    %c0_i32_2 = arith.constant 0 : i32
    return %c0_i32, %c0_i32_0, %c0_i32_1 : i32, i32, i32
  }
  func.func @transform_3(%arg0: i32, %arg1: i32) -> (i32, i32) {
    %c0_i32 = arith.constant 0 : i32
    %c0_i32_0 = arith.constant 0 : i32
    %c0_i32_1 = arith.constant 0 : i32
    return %c0_i32, %c0_i32_0 : i32, i32
  }
  func.func @transform_4(%arg0: i32, %arg1: i32) -> (i32, i32) {
    %c0_i32 = arith.constant 0 : i32
    %c0_i32_0 = arith.constant 0 : i32
    %c0_i32_1 = arith.constant 0 : i32
    return %c0_i32, %c0_i32_0 : i32, i32
  }
  func.func @transform_5(%arg0: i32, %arg1: i32) -> (i32, i32, i32) {
    %c0_i32 = arith.constant 0 : i32
    %c0_i32_0 = arith.constant 0 : i32
    return %arg0, %arg1, %c0_i32 : i32, i32, i32
  }
}

</mosaic_0001>

<llo_original>
// kernel: tpu_custom_call.1
$region0: #{tpu_custom_call.1}
  #allocation0 [shape = 'u32[]', space=smem, size = 0x4, offset = 0x4, fixed_abs, tag = 'smem constant byte address 0x4 - core index']
  #allocation1 [shape = 'u32[144,128]{1,0:T(1,128)}', space=vmem, size = 0x12000, scoped, tag = 'internal scratch']
  %s0 = inlined_call_operand.vmem [shape: f32[2,18,128], index: 0, kind: input, shape index: {}]
  %s1 = inlined_call_operand.vmem [shape: bf16[128,64], index: 1, kind: input, shape index: {}]
  %s2 = inlined_call_operand.vmem [shape: bf16[3,64,128], index: 2, kind: input, shape index: {}]
  %s3 = inlined_call_operand.vmem [shape: f32[1,64], index: 3, kind: input, shape index: {}]
  %s4 = inlined_call_operand.vmem [shape: f32[1,128], index: 4, kind: input, shape index: {}]
  %s5 = inlined_call_operand.hbm [shape: f32[2,16,128], index: 5, kind: output, shape index: {}]
  %s6 = sld [smem:[#allocation0]]
  $region53: #{tpu_custom_call.1} parent=0
    _
  %s8 = ssub.s32 1, %s6
  %s9 = scalar_select 0, %s8, %s6
  $region1: #{tpu_custom_call.1} parent=0
    #allocation2 [shape = 'u8[8192]{0}', space=vmem, size = 0x2000, scoped, tag = 'output window, operand 0']
    #allocation3 [shape = 's32[2]{0}', space=sflag, size = 0x8, scoped, tag = 'scoped memory for tpu_custom_call.1']
    %10 = vsyncpa [#allocation3], 0
    %s11 = scalar_lea.sflag [#allocation3], 1
    %12 = vsyncpa %s11, 0
    loop: start=0, step=1, limit=6
    $region2: #{tpu_custom_call.1} parent=1 // loop_pre_header
      _
    $region3: #{tpu_custom_call.1} parent=1 // loop_header
      %s14 = sphi 0, %s18
      %p15 = scmp.ge.s32.totalorder %s14, 6
      %s21 = sphi 0, %s33
      %s22 = sphi 0, %s29
      %s23 = sphi 0, %s21
      %s24 = sphi 0, %s22
      %s25 = sphi 0, %s23
      %s26 = sphi 0, %s24
      %s36 = sphi 0, %s38
      %s39 = sphi 0, %s36
      %s40 = sphi 0, %s39
      %s56 = sphi 0, %s40
      %s60 = sphi 0, %s60
      %s62 = sphi 0, %s60
      %s63 = sphi 0, %s62
      %s77 = sphi 0, %s63
      %s81 = sphi 0, %s81
      %s83 = sphi 0, %s81
      %s84 = sphi 0, %s83
      %s98 = sphi 0, %s84
      %s102 = sphi 0, %s102
      %s104 = sphi 0, %s102
      %s105 = sphi 0, %s104
      %s119 = sphi 0, %s105
      %s123 = sphi 0, %s123
      %s125 = sphi 0, %s123
      %s126 = sphi 0, %s125
      %s140 = sphi 0, %s126
      %s148 = sphi 0, %s150
      %s151 = sphi 0, %s148
      %s152 = sphi 0, %s151
      %s168 = sphi 0, %s152
    $region4: #{tpu_custom_call.1} parent=1 // loop_header_branch
      %17 = sbr.rel (%p15) target = $region8
    $region5: #{tpu_custom_call.1} parent=1 // loop_body
      %s19 = ssub.s32 %s14, 1
      %s20 = ssub.s32 %s14, 2
      %s27 = sadd.s32 1, %s22
      %p28 = scmp.ge.s32.totalorder %s27, 2
      %s29 = scalar_select %p28, 0, %s27
      %s30 = sadd.s32 1, %s21
      %s31 = scalar_select %p28, %s30, %s21
      %p32 = scmp.ge.s32.totalorder %s31, 2
      %s33 = scalar_select %p32, 0, %s31
      %s34 = ssub.s32 %s21, %s33
      %p35 = scmp.eq.s32.totalorder %s34, 0
      %s37 = sadd.s32 %s36, 1
      %s38 = scalar_select %p35, %s36, %s37
      %p41 = pneg %p35
      %p42 = scmp.eq.s32.totalorder %s14, 3
      %p43 = por %p41, %p42
      %p44 = scmp.ne.s32.totalorder %s36, %s39
      %p45 = scmp.eq.s32.totalorder %s14, 0
      %p46 = por %p44, %p45
      %p47 = scmp.ne.s32.totalorder %s36, %s39
      %p48 = scmp.eq.s32.totalorder %s19, 3
      %p49 = por %p47, %p48
      %p50 = scmp.ne.s32.totalorder %s39, %s40
      %p51 = scmp.eq.s32.totalorder %s19, 0
      %p52 = por %p50, %p51
      %p53 = scmp.ne.s32.totalorder %s39, %s40
      %p54 = scmp.eq.s32.totalorder %s20, 3
      %p55 = por %p53, %p54
      %p57 = scmp.ne.s32.totalorder %s40, %s56
      %p58 = scmp.eq.s32.totalorder %s20, 0
      %p59 = por %p57, %p58
      %s61 = sadd.s32 %s60, 1
      %p64 = scmp.eq.s32.totalorder %s14, 3
      %p65 = scmp.ne.s32.totalorder %s60, %s62
      %p66 = scmp.eq.s32.totalorder %s14, 0
      %p67 = por %p65, %p66
      %p68 = scmp.ne.s32.totalorder %s60, %s62
      %p69 = scmp.eq.s32.totalorder %s19, 3
      %p70 = por %p68, %p69
      %p71 = scmp.ne.s32.totalorder %s62, %s63
      %p72 = scmp.eq.s32.totalorder %s19, 0
      %p73 = por %p71, %p72
      %p74 = scmp.ne.s32.totalorder %s62, %s63
      %p75 = scmp.eq.s32.totalorder %s20, 3
      %p76 = por %p74, %p75
      %p78 = scmp.ne.s32.totalorder %s63, %s77
      %p79 = scmp.eq.s32.totalorder %s20, 0
      %p80 = por %p78, %p79
      %s82 = sadd.s32 %s81, 1
      %p85 = scmp.eq.s32.totalorder %s14, 3
      %p86 = scmp.ne.s32.totalorder %s81, %s83
      %p87 = scmp.eq.s32.totalorder %s14, 0
      %p88 = por %p86, %p87
      %p89 = scmp.ne.s32.totalorder %s81, %s83
      %p90 = scmp.eq.s32.totalorder %s19, 3
      %p91 = por %p89, %p90
      %p92 = scmp.ne.s32.totalorder %s83, %s84
      %p93 = scmp.eq.s32.totalorder %s19, 0
      %p94 = por %p92, %p93
      %p95 = scmp.ne.s32.totalorder %s83, %s84
      %p96 = scmp.eq.s32.totalorder %s20, 3
      %p97 = por %p95, %p96
      %p99 = scmp.ne.s32.totalorder %s84, %s98
      %p100 = scmp.eq.s32.totalorder %s20, 0
      %p101 = por %p99, %p100
      %s103 = sadd.s32 %s102, 1
      %p106 = scmp.eq.s32.totalorder %s14, 3
      %p107 = scmp.ne.s32.totalorder %s102, %s104
      %p108 = scmp.eq.s32.totalorder %s14, 0
      %p109 = por %p107, %p108
      %p110 = scmp.ne.s32.totalorder %s102, %s104
      %p111 = scmp.eq.s32.totalorder %s19, 3
      %p112 = por %p110, %p111
      %p113 = scmp.ne.s32.totalorder %s104, %s105
      %p114 = scmp.eq.s32.totalorder %s19, 0
      %p115 = por %p113, %p114
      %p116 = scmp.ne.s32.totalorder %s104, %s105
      %p117 = scmp.eq.s32.totalorder %s20, 3
      %p118 = por %p116, %p117
      %p120 = scmp.ne.s32.totalorder %s105, %s119
      %p121 = scmp.eq.s32.totalorder %s20, 0
      %p122 = por %p120, %p121
      %s124 = sadd.s32 %s123, 1
      %p127 = scmp.eq.s32.totalorder %s14, 3
      %p128 = scmp.ne.s32.totalorder %s123, %s125
      %p129 = scmp.eq.s32.totalorder %s14, 0
      %p130 = por %p128, %p129
      %p131 = scmp.ne.s32.totalorder %s123, %s125
      %p132 = scmp.eq.s32.totalorder %s19, 3
      %p133 = por %p131, %p132
      %p134 = scmp.ne.s32.totalorder %s125, %s126
      %p135 = scmp.eq.s32.totalorder %s19, 0
      %p136 = por %p134, %p135
      %p137 = scmp.ne.s32.totalorder %s125, %s126
      %p138 = scmp.eq.s32.totalorder %s20, 3
      %p139 = por %p137, %p138
      %p141 = scmp.ne.s32.totalorder %s126, %s140
      %p142 = scmp.eq.s32.totalorder %s20, 0
      %p143 = por %p141, %p142
      %s144 = ssub.s32 %s21, %s33
      %s145 = ssub.s32 %s22, %s29
      %s146 = sor.u32 %s144, %s145
      %p147 = scmp.eq.s32.totalorder %s146, 0
      %s149 = sadd.s32 %s148, 1
      %s150 = scalar_select %p147, %s148, %s149
      %p153 = pneg %p147
      %p154 = scmp.eq.s32.totalorder %s14, 3
      %p155 = por %p153, %p154
      %p156 = scmp.ne.s32.totalorder %s148, %s151
      %p157 = scmp.eq.s32.totalorder %s14, 0
      %p158 = por %p156, %p157
      %p159 = scmp.ne.s32.totalorder %s148, %s151
      %p160 = scmp.eq.s32.totalorder %s19, 3
      %p161 = por %p159, %p160
      %p162 = scmp.ne.s32.totalorder %s151, %s152
      %p163 = scmp.eq.s32.totalorder %s19, 0
      %p164 = por %p162, %p163
      %p165 = scmp.ne.s32.totalorder %s151, %s152
      %p166 = scmp.eq.s32.totalorder %s20, 3
      %p167 = por %p165, %p166
      %p169 = scmp.ne.s32.totalorder %s152, %s168
      %p170 = scmp.eq.s32.totalorder %s20, 0
      %p171 = por %p169, %p170
      %p172 = scmp.le.s32.totalorder 1, %s14
      %p173 = scmp.lt.s32.totalorder %s14, 5
      %p174 = pnand %p172, %p173
      %p175 = pneg %p174
      // Predicated region
      $region9: #{tpu_custom_call.1} parent=5 // pred_check
        _
      $region10: #{tpu_custom_call.1} parent=5 // pred_check_branch
        %177 = sbr.rel (%p174) target = $region12
      $region11: #{tpu_custom_call.1} parent=5 // pred_region
        %s178 = ssub.s32 %s14, 1
        // Predicated region
        $region13: #{tpu_custom_call.1} parent=11 // pred_check
          %p179 = pneg %p73
        $region14: #{tpu_custom_call.1} parent=11 // pred_check_branch
          %181 = sbr.rel (%p179) target = $region16
        $region15: #{tpu_custom_call.1} parent=11 // pred_region
          _
        $region16: #{tpu_custom_call.1} parent=11 // pred_fallthru
          _
        // Predicated region
        $region17: #{tpu_custom_call.1} parent=11 // pred_check
          %p182 = pneg %p94
        $region18: #{tpu_custom_call.1} parent=11 // pred_check_branch
          %184 = sbr.rel (%p182) target = $region20
        $region19: #{tpu_custom_call.1} parent=11 // pred_region
          _
        $region20: #{tpu_custom_call.1} parent=11 // pred_fallthru
          _
        // Predicated region
        $region21: #{tpu_custom_call.1} parent=11 // pred_check
          %p185 = pneg %p115
        $region22: #{tpu_custom_call.1} parent=11 // pred_check_branch
          %187 = sbr.rel (%p185) target = $region24
        $region23: #{tpu_custom_call.1} parent=11 // pred_region
          _
        $region24: #{tpu_custom_call.1} parent=11 // pred_fallthru
          _
        // Predicated region
        $region25: #{tpu_custom_call.1} parent=11 // pred_check
          %p188 = pneg %p136
        $region26: #{tpu_custom_call.1} parent=11 // pred_check_branch
          %190 = sbr.rel (%p188) target = $region28
        $region27: #{tpu_custom_call.1} parent=11 // pred_region
          _
        $region28: #{tpu_custom_call.1} parent=11 // pred_fallthru
          _
      $region12: #{tpu_custom_call.1} parent=5 // pred_fallthru
        _
      %p191 = scmp.lt.s32.totalorder %s14, 4
      // Predicated region
      $region29: #{tpu_custom_call.1} parent=5 // pred_check
        %p192 = pneg %p191
      $region30: #{tpu_custom_call.1} parent=5 // pred_check_branch
        %194 = sbr.rel (%p192) target = $region32
      $region31: #{tpu_custom_call.1} parent=5 // pred_region
        // Predicated region
        $region33: #{tpu_custom_call.1} parent=31 // pred_check
          %p195 = pneg %p46
        $region34: #{tpu_custom_call.1} parent=31 // pred_check_branch
          %197 = sbr.rel (%p195) target = $region36
        $region35: #{tpu_custom_call.1} parent=31 // pred_region
          %p198 = scmp.lt.s32.totalorder %s21, 1
          %s199 = scalar_select %p198, %s21, 1
          %s200 = smul.addr %s199, 3
          %s201 = smul.addr %s200, 8
          %s202 = scalar_lea.vmem %s0, %s201
        $region36: #{tpu_custom_call.1} parent=31 // pred_fallthru
          _
      $region32: #{tpu_custom_call.1} parent=5 // pred_fallthru
        _
      %p203 = scmp.le.s32.totalorder 1, %s14
      %p204 = scmp.lt.s32.totalorder %s14, 5
      %p205 = pnand %p203, %p204
      %p206 = pneg %p205
      // Predicated region
      $region37: #{tpu_custom_call.1} parent=5 // pred_check
        _
      $region38: #{tpu_custom_call.1} parent=5 // pred_check_branch
        %208 = sbr.rel (%p205) target = $region40
      $region39: #{tpu_custom_call.1} parent=5 // pred_region
        %s209 = ssub.s32 %s14, 1
        %p210 = scmp.lt.s32.totalorder %s23, 1
        %s211 = scalar_select %p210, %s23, 1
        %s212 = smul.addr %s211, 3
        %s213 = smul.addr %s212, 8
        %s214 = scalar_lea.vmem %s0, %s213
        %p215 = pneg %p52
        %p216 = pneg %p49
        %p217 = pneg %p73
        %p218 = pneg %p70
        %p219 = pneg %p94
        %p220 = pneg %p91
        %p221 = pneg %p115
        %p222 = pneg %p112
        %p223 = pneg %p136
        %p224 = pneg %p133
        %p225 = pneg %p164
        %p226 = pneg %p161
        %s227 = sand.u32 %s151, 1
        %s228 = scalar_lea.sflag [#allocation3], %s227
        %s229 = sand.u32 %s151, 1
        %s230 = smul.addr %s229, 8
        %s231 = scalar_lea.vmem [#allocation2], %s230
        %p232 = scmp.lt.s32.totalorder %s23, 1
        %s233 = scalar_select %p232, %s23, 1
        %s234 = smul.addr %s233, 3
        %s235 = smul.addr %s234, 8
        %s236 = scalar_lea.vmem %s0, %s235
        %s238 = smul.u32 %s24, 8
        %s239 = scalar_lea.vmem %s236, %s238
        %v240 = vld [vmem:[%s239] sm:$0xff]
        %v241 = vld [vmem:[%s239 + $0x8] sm:$0x3]
        %v242 = vpack.c.bf16 %v241, %v240
        %v243 = vld [vmem:[%s1] sm:$0xf]
        %v244 = vld [vmem:[%s1 + $0x4] sm:$0xf]
        %v245 = vld [vmem:[%s1 + $0x8] sm:$0xf]
        %v246 = vld [vmem:[%s1 + $0xc] sm:$0xf]
        %v247 = vld [vmem:[%s1 + $0x10] sm:$0xf]
        %v248 = vld [vmem:[%s1 + $0x14] sm:$0xf]
        %v249 = vld [vmem:[%s1 + $0x18] sm:$0xf]
        %v250 = vld [vmem:[%s1 + $0x1c] sm:$0xf]
        %v251 = vld [vmem:[%s1 + $0x20] sm:$0xf]
        %v252 = vld [vmem:[%s1 + $0x24] sm:$0xf]
        %v253 = vld [vmem:[%s1 + $0x28] sm:$0xf]
        %v254 = vld [vmem:[%s1 + $0x2c] sm:$0xf]
        %v255 = vld [vmem:[%s1 + $0x30] sm:$0xf]
        %v256 = vld [vmem:[%s1 + $0x34] sm:$0xf]
        %v257 = vld [vmem:[%s1 + $0x38] sm:$0xf]
        %v258 = vld [vmem:[%s1 + $0x3c] sm:$0xf]
        %v259 = vld [vmem:[%s3] sm:$0x1]
        %v261 = vlaneseq
        %v262 = vshrl.u32 %v261, 7
        %v263 = vsub.s32 0, %v262
        %v264 = vrot.slane %v259, %v263
        %v282 = vunpack.c.l.b16 %v243
        %v283 = vunpack.c.l.b16 %v244
        %v284 = vunpack.c.l.b16 %v245
        %v285 = vunpack.c.l.b16 %v246
        %v286 = vunpack.c.l.b16 %v247
        %v287 = vunpack.c.l.b16 %v248
        %v288 = vunpack.c.l.b16 %v249
        %v289 = vunpack.c.l.b16 %v250
        %v290 = vunpack.c.l.b16 %v251
        %v291 = vunpack.c.l.b16 %v252
        %v292 = vunpack.c.l.b16 %v253
        %v293 = vunpack.c.l.b16 %v254
        %v294 = vunpack.c.l.b16 %v255
        %v295 = vunpack.c.l.b16 %v256
        %v296 = vunpack.c.l.b16 %v257
        %v297 = vunpack.c.l.b16 %v258
        %v298 = vpack.c.b16 %v283, %v282
        %v299 = vpack.c.b16 %v285, %v284
        %v300 = vpack.c.b16 %v287, %v286
        %v301 = vpack.c.b16 %v289, %v288
        %v302 = vpack.c.b16 %v291, %v290
        %v303 = vpack.c.b16 %v293, %v292
        %v304 = vpack.c.b16 %v295, %v294
        %v305 = vpack.c.b16 %v297, %v296
        %314 = vmatprep.subr.bf16.mxu0 0
        %315 = vmatpush1.bf16.msra.mxu0 %v298
        %316 = vmatprep.subr.bf16.mxu0 0
        %317 = vmatpush1.bf16.msra.mxu0 %v299
        %318 = vmatprep.subr.bf16.mxu0 0
        %319 = vmatpush1.bf16.msra.mxu0 %v300
        %320 = vmatprep.subr.bf16.mxu0 0
        %321 = vmatpush1.bf16.msra.mxu0 %v301
        %322 = vmatprep.subr.bf16.mxu0 0
        %323 = vmatpush1.bf16.msra.mxu0 %v302
        %324 = vmatprep.subr.bf16.mxu0 0
        %325 = vmatpush1.bf16.msra.mxu0 %v303
        %326 = vmatprep.subr.bf16.mxu0 0
        %327 = vmatpush1.bf16.msra.mxu0 %v304
        %328 = vmatprep.subr.bf16.mxu0 0
        %329 = vmatpush1.bf16.msra.mxu0 %v305
        %330 = vmatprep.subr.bf16.mxu0 0
        %331 = vmatpush1.bf16.msra.mxu0 0
        %332 = vmatprep.subr.bf16.mxu0 0
        %333 = vmatpush1.bf16.msra.mxu0 0
        %334 = vmatprep.subr.bf16.mxu0 0
        %335 = vmatpush1.bf16.msra.mxu0 0
        %336 = vmatprep.subr.bf16.mxu0 0
        %337 = vmatpush1.bf16.msra.mxu0 0
        %338 = vmatprep.subr.bf16.mxu0 0
        %339 = vmatpush1.bf16.msra.mxu0 0
        %340 = vmatprep.subr.bf16.mxu0 0
        %341 = vmatpush1.bf16.msra.mxu0 0
        %342 = vmatprep.subr.bf16.mxu0 0
        %343 = vmatpush1.bf16.msra.mxu0 0
        %344 = vmatprep.subr.bf16.mxu0 0
        %345 = vmatpush1.bf16.msra.mxu0 0
        %346 = vmatprep.mubr.bf16.mxu0 0
        %347 = vmatmul.mubr.bf16.gmra.mrb[0].mxu0 %v242
        %v348 = vpop.f32.mrb[0].mxu0
        %v349 = vadd.f32 %v264, %v348
        %v350 = vpop.f32.mrb[0].mxu0
        %v351 = vpop.f32.mrb[0].mxu0
        %v352 = vadd.f32 %v264, %v351
        %v353 = vpop.f32.mrb[0].mxu0
        %354 = vdwg.mxu0
        %v355 = vxor.u32 %v349, 2147483648
        %v356 = vxor.u32 %v352, 2147483648
        %v357 = vmul.f32 %v355, 1.442695
        %v358 = vpow.pop %v357
        %v359 = vmul.f32 %v356, 1.442695
        %v360 = vpow.pop %v359
        %v361 = vadd.f32 %v358, 1.0
        %v362 = vadd.f32 %v360, 1.0
        %v363 = vrcp.pop %v361
        %v364 = vmul.f32 1.0, %v363
        %v365 = vrcp.pop %v362
        %v366 = vmul.f32 1.0, %v365
        %v367 = vmul.f32 %v349, %v364
        %v368 = vmul.f32 %v352, %v366
        %v369 = vlaneseq
        %v370 = vshrl.u32 %v369, 7
        %v371 = vadd.s32 %v370, 8
        %v372 = vstv %s238
        %v373 = vadd.s32 %v372, %v370
        %v374 = vadd.s32 %v372, %v371
        %vm375 = vcmp.ge.s32.totalorder %v373, 1
        %vm376 = vcmp.ge.s32.totalorder %v374, 1
        %vm377 = vcmp.le.s32.totalorder %v373, 16
        %vm378 = vcmp.le.s32.totalorder %v374, 16
        %vm379 = vmand %vm375, %vm377
        %vm380 = vmand %vm376, %vm378
        %v381 = vsel %vm379, 1, 0
        %v382 = vsel %vm380, 1, 0
        %vm383 = vcmp.eq.s32.totalorder %v381, 1
        %vm384 = vcmp.eq.s32.totalorder %v382, 1
        %v385 = vsel %vm383, %v367, 0.0
        %v386 = vsel %vm384, %v368, 0.0
        %v387 = vpack.c.bf16 %v386, %v385
        %v388 = vld [vmem:[%s2] sm:$0xf]
        %v389 = vld [vmem:[%s2 + $0x4] sm:$0xf]
        %v390 = vld [vmem:[%s2 + $0x8] sm:$0xf]
        %v391 = vld [vmem:[%s2 + $0xc] sm:$0xf]
        %v392 = vld [vmem:[%s2 + $0x10] sm:$0xf]
        %v393 = vld [vmem:[%s2 + $0x14] sm:$0xf]
        %v394 = vld [vmem:[%s2 + $0x18] sm:$0xf]
        %v395 = vld [vmem:[%s2 + $0x1c] sm:$0xf]
        %s396 = scalar_lea.vmem %s2, 32
        %v397 = vld [vmem:[%s396] sm:$0xf]
        %v398 = vld [vmem:[%s396 + $0x4] sm:$0xf]
        %v399 = vld [vmem:[%s396 + $0x8] sm:$0xf]
        %v400 = vld [vmem:[%s396 + $0xc] sm:$0xf]
        %v401 = vld [vmem:[%s396 + $0x10] sm:$0xf]
        %v402 = vld [vmem:[%s396 + $0x14] sm:$0xf]
        %v403 = vld [vmem:[%s396 + $0x18] sm:$0xf]
        %v404 = vld [vmem:[%s396 + $0x1c] sm:$0xf]
        %v406 = vshrl.u32 %v387, 16
        %v408 = vshll.u32 %v387, 16
        %v410 = vrot.slane %v408, 1
        %v411 = vor.u32 %v406, %v410
        %v420 = vunpack.c.l.b16 %v397
        %v421 = vunpack.c.l.b16 %v398
        %v422 = vunpack.c.l.b16 %v399
        %v423 = vunpack.c.l.b16 %v400
        %v424 = vunpack.c.l.b16 %v401
        %v425 = vunpack.c.l.b16 %v402
        %v426 = vunpack.c.l.b16 %v403
        %v427 = vunpack.c.l.b16 %v404
        %v428 = vpack.c.b16 %v421, %v420
        %v429 = vpack.c.b16 %v423, %v422
        %v430 = vpack.c.b16 %v425, %v424
        %v431 = vpack.c.b16 %v427, %v426
        %vm436 = vcmask 523264
        %v438 = vsel %vm436, %v411, 0
        %440 = vmatprep.subr.bf16.mxu0 0
        %441 = vmatpush1.bf16.msra.mxu0 %v428
        %442 = vmatprep.subr.bf16.mxu0 0
        %443 = vmatpush1.bf16.msra.mxu0 %v429
        %444 = vmatprep.subr.bf16.mxu0 0
        %445 = vmatpush1.bf16.msra.mxu0 %v430
        %446 = vmatprep.subr.bf16.mxu0 0
        %447 = vmatpush1.bf16.msra.mxu0 %v431
        %448 = vmatprep.subr.bf16.mxu0 0
        %449 = vmatpush1.bf16.msra.mxu0 0
        %450 = vmatprep.subr.bf16.mxu0 0
        %451 = vmatpush1.bf16.msra.mxu0 0
        %452 = vmatprep.subr.bf16.mxu0 0
        %453 = vmatpush1.bf16.msra.mxu0 0
        %454 = vmatprep.subr.bf16.mxu0 0
        %455 = vmatpush1.bf16.msra.mxu0 0
        %456 = vmatprep.subr.bf16.mxu0 0
        %457 = vmatpush1.bf16.msra.mxu0 0
        %458 = vmatprep.subr.bf16.mxu0 0
        %459 = vmatpush1.bf16.msra.mxu0 0
        %460 = vmatprep.subr.bf16.mxu0 0
        %461 = vmatpush1.bf16.msra.mxu0 0
        %462 = vmatprep.subr.bf16.mxu0 0
        %463 = vmatpush1.bf16.msra.mxu0 0
        %464 = vmatprep.subr.bf16.mxu0 0
        %465 = vmatpush1.bf16.msra.mxu0 0
        %466 = vmatprep.subr.bf16.mxu0 0
        %467 = vmatpush1.bf16.msra.mxu0 0
        %468 = vmatprep.subr.bf16.mxu0 0
        %469 = vmatpush1.bf16.msra.mxu0 0
        %470 = vmatprep.subr.bf16.mxu0 0
        %471 = vmatpush1.bf16.msra.mxu0 0
        %472 = vmatprep.mubr.bf16.mxu0 0
        %473 = vmatmul.mubr.bf16.gmra.mrb[0].mxu0 %v438
        %v474 = vpop.f32.mrb[0].mxu0
        %v475 = vadd.f32 0.0, %v474
        %v476 = vpop.f32.mrb[0].mxu0
        %v477 = vpop.f32.mrb[0].mxu0
        %v478 = vpop.f32.mrb[0].mxu0
        %479 = vdwg.mxu0
        %v488 = vunpack.c.l.b16 %v388
        %v489 = vunpack.c.l.b16 %v389
        %v490 = vunpack.c.l.b16 %v390
        %v491 = vunpack.c.l.b16 %v391
        %v492 = vunpack.c.l.b16 %v392
        %v493 = vunpack.c.l.b16 %v393
        %v494 = vunpack.c.l.b16 %v394
        %v495 = vunpack.c.l.b16 %v395
        %v496 = vpack.c.b16 %v489, %v488
        %v497 = vpack.c.b16 %v491, %v490
        %v498 = vpack.c.b16 %v493, %v492
        %v499 = vpack.c.b16 %v495, %v494
        %v504 = vsel %vm436, %v387, 0
        %506 = vmatprep.subr.bf16.mxu0 0
        %507 = vmatpush1.bf16.msra.mxu0 %v496
        %508 = vmatprep.subr.bf16.mxu0 0
        %509 = vmatpush1.bf16.msra.mxu0 %v497
        %510 = vmatprep.subr.bf16.mxu0 0
        %511 = vmatpush1.bf16.msra.mxu0 %v498
        %512 = vmatprep.subr.bf16.mxu0 0
        %513 = vmatpush1.bf16.msra.mxu0 %v499
        %514 = vmatprep.subr.bf16.mxu0 0
        %515 = vmatpush1.bf16.msra.mxu0 0
        %516 = vmatprep.subr.bf16.mxu0 0
        %517 = vmatpush1.bf16.msra.mxu0 0
        %518 = vmatprep.subr.bf16.mxu0 0
        %519 = vmatpush1.bf16.msra.mxu0 0
        %520 = vmatprep.subr.bf16.mxu0 0
        %521 = vmatpush1.bf16.msra.mxu0 0
        %522 = vmatprep.subr.bf16.mxu0 0
        %523 = vmatpush1.bf16.msra.mxu0 0
        %524 = vmatprep.subr.bf16.mxu0 0
        %525 = vmatpush1.bf16.msra.mxu0 0
        %526 = vmatprep.subr.bf16.mxu0 0
        %527 = vmatpush1.bf16.msra.mxu0 0
        %528 = vmatprep.subr.bf16.mxu0 0
        %529 = vmatpush1.bf16.msra.mxu0 0
        %530 = vmatprep.subr.bf16.mxu0 0
        %531 = vmatpush1.bf16.msra.mxu0 0
        %532 = vmatprep.subr.bf16.mxu0 0
        %533 = vmatpush1.bf16.msra.mxu0 0
        %534 = vmatprep.subr.bf16.mxu0 0
        %535 = vmatpush1.bf16.msra.mxu0 0
        %536 = vmatprep.subr.bf16.mxu0 0
        %537 = vmatpush1.bf16.msra.mxu0 0
        %538 = vmatprep.mubr.bf16.mxu0 0
        %539 = vmatmul.mubr.bf16.gmra.mrb[0].mxu0 %v504
        %v540 = vpop.f32.mrb[0].mxu0
        %v541 = vadd.f32 %v475, %v540
        %v542 = vpop.f32.mrb[0].mxu0
        %v543 = vpop.f32.mrb[0].mxu0
        %v544 = vpop.f32.mrb[0].mxu0
        %545 = vdwg.mxu0
        %s546 = scalar_lea.vmem %s2, 64
        %v547 = vld [vmem:[%s546] sm:$0xf]
        %v548 = vld [vmem:[%s546 + $0x4] sm:$0xf]
        %v549 = vld [vmem:[%s546 + $0x8] sm:$0xf]
        %v550 = vld [vmem:[%s546 + $0xc] sm:$0xf]
        %v551 = vld [vmem:[%s546 + $0x10] sm:$0xf]
        %v552 = vld [vmem:[%s546 + $0x14] sm:$0xf]
        %v553 = vld [vmem:[%s546 + $0x18] sm:$0xf]
        %v554 = vld [vmem:[%s546 + $0x1c] sm:$0xf]
        %v556 = vrot.slane %v387, 1
        %v565 = vunpack.c.l.b16 %v547
        %v566 = vunpack.c.l.b16 %v548
        %v567 = vunpack.c.l.b16 %v549
        %v568 = vunpack.c.l.b16 %v550
        %v569 = vunpack.c.l.b16 %v551
        %v570 = vunpack.c.l.b16 %v552
        %v571 = vunpack.c.l.b16 %v553
        %v572 = vunpack.c.l.b16 %v554
        %v573 = vpack.c.b16 %v566, %v565
        %v574 = vpack.c.b16 %v568, %v567
        %v575 = vpack.c.b16 %v570, %v569
        %v576 = vpack.c.b16 %v572, %v571
        %v582 = vsel %vm436, %v556, 0
        %584 = vmatprep.subr.bf16.mxu0 0
        %585 = vmatpush1.bf16.msra.mxu0 %v573
        %586 = vmatprep.subr.bf16.mxu0 0
        %587 = vmatpush1.bf16.msra.mxu0 %v574
        %588 = vmatprep.subr.bf16.mxu0 0
        %589 = vmatpush1.bf16.msra.mxu0 %v575
        %590 = vmatprep.subr.bf16.mxu0 0
        %591 = vmatpush1.bf16.msra.mxu0 %v576
        %592 = vmatprep.subr.bf16.mxu0 0
        %593 = vmatpush1.bf16.msra.mxu0 0
        %594 = vmatprep.subr.bf16.mxu0 0
        %595 = vmatpush1.bf16.msra.mxu0 0
        %596 = vmatprep.subr.bf16.mxu0 0
        %597 = vmatpush1.bf16.msra.mxu0 0
        %598 = vmatprep.subr.bf16.mxu0 0
        %599 = vmatpush1.bf16.msra.mxu0 0
        %600 = vmatprep.subr.bf16.mxu0 0
        %601 = vmatpush1.bf16.msra.mxu0 0
        %602 = vmatprep.subr.bf16.mxu0 0
        %603 = vmatpush1.bf16.msra.mxu0 0
        %604 = vmatprep.subr.bf16.mxu0 0
        %605 = vmatpush1.bf16.msra.mxu0 0
        %606 = vmatprep.subr.bf16.mxu0 0
        %607 = vmatpush1.bf16.msra.mxu0 0
        %608 = vmatprep.subr.bf16.mxu0 0
        %609 = vmatpush1.bf16.msra.mxu0 0
        %610 = vmatprep.subr.bf16.mxu0 0
        %611 = vmatpush1.bf16.msra.mxu0 0
        %612 = vmatprep.subr.bf16.mxu0 0
        %613 = vmatpush1.bf16.msra.mxu0 0
        %614 = vmatprep.subr.bf16.mxu0 0
        %615 = vmatpush1.bf16.msra.mxu0 0
        %616 = vmatprep.mubr.bf16.mxu0 0
        %617 = vmatmul.mubr.bf16.gmra.mrb[0].mxu0 %v582
        %v618 = vpop.f32.mrb[0].mxu0
        %v619 = vadd.f32 0.0, %v618
        %v620 = vpop.f32.mrb[0].mxu0
        %v621 = vpop.f32.mrb[0].mxu0
        %v622 = vpop.f32.mrb[0].mxu0
        %623 = vdwg.mxu0
        %v624 = vadd.f32 %v541, %v619
        %v625 = vld [vmem:[%s4] sm:$0x1]
        %v627 = vlaneseq
        %v628 = vshrl.u32 %v627, 7
        %v629 = vsub.s32 0, %v628
        %v630 = vrot.slane %v625, %v629
        %v632 = vadd.f32 %v624, %v630
        %v633 = vxor.u32 %v632, 2147483648
        %v634 = vmul.f32 %v633, 1.442695
        %v635 = vpow.pop %v634
        %v636 = vadd.f32 %v635, 1.0
        %v637 = vrcp.pop %v636
        %v638 = vmul.f32 1.0, %v637
        %v639 = vmul.f32 %v632, %v638
        %vm642 = vcmask 1046528
        %v643 = vrot.slane %v240, 1
        %v644 = vrot.slane %v241, 1
        %v645 = vsel %vm642, %v643, %v644
        %v647 = vadd.f32 %v639, %v645
        %648 = vst [vmem:[%s231] sm:$0xff] %v647
        %s649 = sand.u32 %s151, 1
        %s650 = scalar_lea.sflag [#allocation3], %s649
        %s651 = sand.u32 %s151, 1
        %s652 = smul.addr %s651, 8
        %s653 = scalar_lea.vmem [#allocation2], %s652
        // Predicated region
        $region41: #{tpu_custom_call.1} parent=39 // pred_check
          %p654 = pneg %p161
        $region42: #{tpu_custom_call.1} parent=39 // pred_check_branch
          %656 = sbr.rel (%p654) target = $region44
        $region43: #{tpu_custom_call.1} parent=39 // pred_region
          %s658 = ssub.s32 128, 128
          %659 = vsyncadd %s650, %s658
          %s660 = smul.addr %s23, 2
          %s661 = sadd.s32 %s24, %s660
          %s662 = smul.addr %s661, 128
          %s663 = scalar_lea.hbm %s5, %s662
          %s665 = sshll.u32 %s653, 4
          %s666 = int_to_ptr.vmem [resolvable:$true] %s665
          %668 = dma.vmem_to_hbm [thread:$0]  %s666, 128, %s663, %s650
        $region44: #{tpu_custom_call.1} parent=39 // pred_fallthru
          _
      $region40: #{tpu_custom_call.1} parent=5 // pred_fallthru
        _
      %p669 = scmp.le.s32.totalorder 2, %s14
      // Predicated region
      $region45: #{tpu_custom_call.1} parent=5 // pred_check
        %p670 = pneg %p669
      $region46: #{tpu_custom_call.1} parent=5 // pred_check_branch
        %672 = sbr.rel (%p670) target = $region48
      $region47: #{tpu_custom_call.1} parent=5 // pred_region
        %s673 = ssub.s32 %s14, 2
        // Predicated region
        $region49: #{tpu_custom_call.1} parent=47 // pred_check
          %p674 = pneg %p167
        $region50: #{tpu_custom_call.1} parent=47 // pred_check_branch
          %676 = sbr.rel (%p674) target = $region52
        $region51: #{tpu_custom_call.1} parent=47 // pred_region
          %s677 = sand.u32 %s152, 1
          %s678 = scalar_lea.sflag [#allocation3], %s677
          %s679 = sand.u32 %s152, 1
          %s680 = smul.addr %s679, 8
          %s681 = scalar_lea.vmem [#allocation2], %s680
          %682 = dma.done %s678, 128
        $region52: #{tpu_custom_call.1} parent=47 // pred_fallthru
          _
      $region48: #{tpu_custom_call.1} parent=5 // pred_fallthru
        _
    $region6: #{tpu_custom_call.1} parent=1 // loop_footer
      %s18 = sadd.s32 1, %s14
    $region7: #{tpu_custom_call.1} parent=1 // loop_footer_branch
      %13 = sbr.rel target = $region3
    $region8: #{tpu_custom_call.1} parent=1 // loop_exit
      _
    %683 = vsyncpa [#allocation3], 1
    %s684 = scalar_lea.sflag [#allocation3], 1
    %685 = vsyncpa %s684, 1

</llo_original>
